<compile_context>
chip_gen: v7x
topology: tpu7x:2x2x1
jax: 0.10.0
libtpu: 0.0.40
codegen_flags: <defaults>
</compile_context>

<pallas_src>
import functools

import jax
import jax.numpy as jnp
from jax import lax
from jax.experimental import pallas as pl
from jax.experimental.pallas import tpu as pltpu


def _round_up(x, m):
    return ((x + m - 1) // m) * m


def _cdiv(a, b):
    return (a + b - 1) // b


def _vmem_capacity_bytes():
    try:
        return int(pltpu.get_tpu_info().vmem_capacity_bytes)
    except Exception:
        return 64 * 1024 * 1024  # conservative fallback (v7x per-TensorCore)


def _select_tiles(B, D, C_pad, x_itemsize, w_itemsize, vmem_budget,
                  tk_override=None):
    """Pick (TB, TK) so double-buffered x/out/weight tiles fit the budget."""
    # --- K tile: keep the (double-buffered) weight slab within ~1/3 budget ---
    if tk_override is not None:
        TK = int(tk_override)
    else:
        w_full = 2 * D * C_pad * w_itemsize
        if w_full <= vmem_budget // 3:
            TK = D
        else:
            TK = (vmem_budget // 3) // (2 * C_pad * w_itemsize)
            TK = max(128, (TK // 128) * 128)          # lane-aligned K tile
    if TK >= D:
        TK = D                                        # single K block (full dim)

    # --- batch tile from the remaining budget ---
    fixed = 2 * TK * C_pad * w_itemsize + 2 * 8 * C_pad * 4       # weight + bias
    per_row = 2 * TK * x_itemsize + 2 * C_pad * 4                 # x + out tiles
    avail = max(vmem_budget - fixed, 8 * per_row)
    tb = avail // per_row
    tb = min(tb, 2048, _round_up(B, 8))
    if tb >= 256:
        tb = (tb // 256) * 256     # MXU-M aligned (256 v6e/v7x, multiple of 128 v5e)
    else:
        tb = max(8, (tb // 8) * 8)
    return int(tb), int(TK)


def _linear_kernel(x_ref, w_ref, b_ref, o_ref, *, d_total, tk,
                   compute_dtype, precision):
    """One (batch-tile, K-tile) step of out = x @ W^T + b.

    x_ref: (TB, TK) input dtype     w_ref: (TK, C_pad) compute_dtype
    b_ref: (1, C_pad) f32           o_ref: (TB, C_pad) f32 (resident over k)
    """
    k = pl.program_id(1)

    xb = x_ref[...]
    if d_total % tk != 0:
        # Ragged K tail: zero the out-of-range columns (the padded weight rows
        # are already exact zeros), so the OOB contribution is exactly 0.
        col = lax.broadcasted_iota(jnp.int32, xb.shape, 1)
        xb = jnp.where(k * tk + col < d_total, xb, jnp.zeros_like(xb))

    # (TB, K) x (K, C_pad) -> (TB, C_pad), f32 accumulation on the MXU.
    partial = lax.dot_general(
        xb.astype(compute_dtype), w_ref[...],
        dimension_numbers=(((1,), (0,)), ((), ())),
        preferred_element_type=jnp.float32,
        precision=precision,
    )

    @pl.when(k == 0)
    def _():
        o_ref[...] = b_ref[...] + partial             # init with bias

    @pl.when(k != 0)
    def _():
        o_ref[...] = o_ref[...] + partial             # accumulate in f32


def logistic_regression_forward(x, weight, bias, *,
                                compute_dtype=jnp.bfloat16,
                                precision=None,
                                use_pallas=None,
                                _tk_override=None):
    """Forward of Logstic_Regression: out = x @ weight.T + bias (float32 out).

    x:      (batch, in_dim)    weight: (n_class, in_dim)    bias: (n_class,)
    """
    B, D = x.shape
    C, D2 = weight.shape
    assert D == D2, "in_dim mismatch"

    # Tiny problems: pallas_call launch overhead dominates -> let XLA fuse it.
    if use_pallas is None:
        use_pallas = (2 * B * D * C) >= (1 << 22)
    if not use_pallas:
        return (x.astype(jnp.float32) @ weight.astype(jnp.float32).T
                + bias.astype(jnp.float32))

    C_pad = _round_up(C, 128)                          # lane-dense output width
    x_item = jnp.dtype(x.dtype).itemsize
    w_item = jnp.dtype(compute_dtype).itemsize

    vmem_cap = _vmem_capacity_bytes()
    vmem_budget = (vmem_cap * 45) // 100               # generation-aware budget
    TB, TK = _select_tiles(B, D, C_pad, x_item, w_item, vmem_budget, _tk_override)

    nk = _cdiv(D, TK)
    nb = _cdiv(B, TB)
    D_pad = nk * TK

    # One-time weight prep: transpose to (K, N) so the RHS is MXU-native
    # (classes on lanes), cast to compute dtype, zero-pad K tail & classes.
    wT = weight.astype(compute_dtype).T                # (D, C)
    w_pad = jnp.zeros((D_pad, C_pad), dtype=compute_dtype).at[:D, :C].set(wT)
    b_pad = jnp.zeros((1, C_pad), dtype=jnp.float32).at[0, :C].set(
        bias.astype(jnp.float32))
    # x is passed through unpadded/uncast (no extra HBM pass); it is cast to
    # compute_dtype per tile inside the kernel.

    # VMEM accounting: every BlockSpec tile is double-buffered by default.
    vmem_needed = (2 * TB * TK * x_item            # x tiles
                   + 2 * TK * C_pad * w_item       # weight tiles
                   + 2 * 8 * C_pad * 4             # bias tile (sublane-padded)
                   + 2 * TB * C_pad * 4)           # out tiles (resident over k)
    vmem_limit = max(2 * vmem_needed, 16 * 1024 * 1024)
    vmem_limit = min(vmem_limit, vmem_cap - 2 * 1024 * 1024)
    vmem_limit = max(vmem_limit, vmem_needed + 1 * 1024 * 1024)

    cost = pl.CostEstimate(
        flops=2 * B * D * C_pad,
        transcendentals=0,
        bytes_accessed=(B * D * x_item + D_pad * C_pad * w_item
                        + B * C_pad * 4 + C_pad * 4),
    )

    kernel = functools.partial(_linear_kernel, d_total=D, tk=TK,
                               compute_dtype=compute_dtype, precision=precision)

    out_pad = pl.pallas_call(
        kernel,
        out_shape=jax.ShapeDtypeStruct((B, C_pad), jnp.float32),
        grid_spec=pltpu.PrefetchScalarGridSpec(
            num_scalar_prefetch=0,
            grid=(nb, nk),                                    # batch, then K (last)
            in_specs=[
                pl.BlockSpec((TB, TK), lambda i, k: (i, k)),        # x
                pl.BlockSpec((TK, C_pad), lambda i, k: (k, 0)),     # weight (K,N)
                pl.BlockSpec((1, C_pad), lambda i, k: (0, 0)),      # bias
            ],
            out_specs=pl.BlockSpec((TB, C_pad), lambda i, k: (i, 0)),
        ),
        compiler_params=pltpu.CompilerParams(
            # On v7x, consider pltpu.CORE_PARALLEL for the batch axis if xprof
            # shows one TensorCore idle.
            dimension_semantics=("parallel", "arbitrary"),
            vmem_limit_bytes=int(vmem_limit),
        ),
        cost_estimate=cost,
    )(x, w_pad, b_pad)

    return out_pad[:, :C]   # drop class padding (no batch padding was added)


if __name__ == "__main__":
    key = jax.random.PRNGKey(0)

    def make_inputs(batch, in_dim, n_class, salt):
        k_x, k_w, k_b = jax.random.split(jax.random.fold_in(key, salt), 3)
        x = jax.random.normal(k_x, (batch, in_dim), dtype=jnp.float32)
        bound = 1.0 / (in_dim ** 0.5)   # mimics nn.Linear's default init range
        w = jax.random.uniform(k_w, (n_class, in_dim), dtype=jnp.float32,
                               minval=-bound, maxval=bound)
        b = jax.random.uniform(k_b, (n_class,), dtype=jnp.float32,
                               minval=-bound, maxval=bound)
        return x, w, b

    def bf16_ref(x, w, b):
        xq = x.astype(jnp.bfloat16).astype(jnp.float32)
        wq = w.astype(jnp.bfloat16).astype(jnp.float32)
        return xq @ wq.T + b

    # 1) Tiny module-scale shape: auto-dispatches to the XLA fallback (exact).
    x, w, b = make_inputs(8, 32, 10, 0)
    out = jax.block_until_ready(logistic_regression_forward(x, w, b))
    ref = x @ w.T + b
    assert out.shape == (8, 10)
    assert jnp.allclose(out, ref, atol=1e-5, rtol=1e-5)

    # 2) Pallas path, bf16 MXU, ragged last batch block (B=300 -> TB=256), nk=1.
    x, w, b = make_inputs(300, 160, 10, 1)
    out = jax.block_until_ready(
        logistic_regression_forward(x, w, b, use_pallas=True))
    assert out.shape == (300, 10)
    assert jnp.allclose(out, bf16_ref(x, w, b), atol=1e-2, rtol=1e-2)

    # 3) Pallas path with forced K-tiling (D=320, TK=128 -> ragged K tail).
    x, w, b = make_inputs(64, 320, 10, 2)
    out = jax.block_until_ready(
        logistic_regression_forward(x, w, b, use_pallas=True, _tk_override=128))
    assert out.shape == (64, 10)
    assert jnp.allclose(out, bf16_ref(x, w, b), atol=1e-2, rtol=1e-2)

    # 4) Pallas path in f32 (tight check of the kernel structure / indexing).
    x, w, b = make_inputs(128, 256, 10, 3)
    out = jax.block_until_ready(
        logistic_regression_forward(x, w, b, use_pallas=True,
                                    compute_dtype=jnp.float32))
    ref = x @ w.T + b
    assert out.shape == (128, 10)
    assert jnp.allclose(out, ref, atol=1e-4, rtol=1e-4)

    print("KERNEL_OK")
</pallas_src>

<mosaic_0001>
module attributes {stable_mosaic.version = 11 : i64} {
  func.func @_linear_kernel(%arg0: i32, %arg1: i32, %arg2: memref<256x160xf32, #tpu.memory_space<vmem>>, %arg3: memref<160x128xbf16, #tpu.memory_space<vmem>>, %arg4: memref<1x128xf32, #tpu.memory_space<vmem>>, %arg5: memref<256x128xf32, #tpu.memory_space<vmem>>) attributes {dimension_semantics = [#tpu.dimension_semantics<parallel>, #tpu.dimension_semantics<arbitrary>], iteration_bounds = array<i64: 2, 1>, scalar_prefetch = 0 : i64, scratch_operands = 0 : i64, tpu.core_type = #tpu.core_type<tc>, window_params = [{transform_indices = @transform_0, window_bounds = array<i64: 256, 160>}, {transform_indices = @transform_1, window_bounds = array<i64: 160, 128>}, {pipeline_mode = #tpu.pipeline_mode<synchronous>, transform_indices = @transform_2, window_bounds = array<i64: 1, 128>}, {transform_indices = @transform_3, window_bounds = array<i64: 256, 128>}]} {
    %c0 = arith.constant 0 : index
    %c0_0 = arith.constant 0 : index
    %0 = vector.load %arg2[%c0, %c0_0] : memref<256x160xf32, #tpu.memory_space<vmem>>, vector<256x160xf32>
    %1 = arith.truncf %0 : vector<256x160xf32> to vector<256x160xbf16>
    %c0_1 = arith.constant 0 : index
    %c0_2 = arith.constant 0 : index
    %2 = vector.load %arg3[%c0_1, %c0_2] : memref<160x128xbf16, #tpu.memory_space<vmem>>, vector<160x128xbf16>
    %cst = arith.constant dense<0.000000e+00> : vector<256x128xf32>
    %3 = tpu.matmul %1, %2, %cst {dimension_numbers = #tpu.dot_dimension_numbers<[1], [0], [0], [1], [0, 0, 1, 1], [], []>} : vector<256x160xbf16>, vector<160x128xbf16>, vector<256x128xf32> -> vector<256x128xf32>
    %c0_i32 = arith.constant 0 : i32
    %4 = arith.cmpi eq, %arg1, %c0_i32 : i32
    %5 = arith.extui %4 : i1 to i32
    %c0_i32_3 = arith.constant 0 : i32
    %6 = arith.cmpi ne, %5, %c0_i32_3 : i32
    scf.if %6 {
      %c0_6 = arith.constant 0 : index
      %c0_7 = arith.constant 0 : index
      %10 = vector.load %arg4[%c0_6, %c0_7] : memref<1x128xf32, #tpu.memory_space<vmem>>, vector<1x128xf32>
      %11 = vector.broadcast %10 : vector<1x128xf32> to vector<256x128xf32>
      %12 = arith.addf %11, %3 : vector<256x128xf32>
      %c0_8 = arith.constant 0 : index
      %c0_9 = arith.constant 0 : index
      %13 = vector.load %arg5[%c0_8, %c0_9] : memref<256x128xf32, #tpu.memory_space<vmem>>, vector<256x128xf32>
      tpu.vector_store %arg5[%c0_8, %c0_9], %12 {strides = array<i32>} : memref<256x128xf32, #tpu.memory_space<vmem>>, vector<256x128xf32>,
    } else {
    }
    %c0_i32_4 = arith.constant 0 : i32
    %7 = arith.cmpi ne, %arg1, %c0_i32_4 : i32
    %8 = arith.extui %7 : i1 to i32
    %c0_i32_5 = arith.constant 0 : i32
    %9 = arith.cmpi ne, %8, %c0_i32_5 : i32
    scf.if %9 {
      %c0_6 = arith.constant 0 : index
      %c0_7 = arith.constant 0 : index
      %10 = vector.load %arg5[%c0_6, %c0_7] : memref<256x128xf32, #tpu.memory_space<vmem>>, vector<256x128xf32>
      %11 = arith.addf %10, %3 : vector<256x128xf32>
      %c0_8 = arith.constant 0 : index
      %c0_9 = arith.constant 0 : index
      %12 = vector.load %arg5[%c0_8, %c0_9] : memref<256x128xf32, #tpu.memory_space<vmem>>, vector<256x128xf32>
      tpu.vector_store %arg5[%c0_8, %c0_9], %11 {strides = array<i32>} : memref<256x128xf32, #tpu.memory_space<vmem>>, vector<256x128xf32>,
    } else {
    }
    return
  }
  func.func @transform_0(%arg0: i32, %arg1: i32) -> (i32, i32) {
    %c0_i32 = arith.constant 0 : i32
    return %arg0, %arg1 : i32, i32
  }
  func.func @transform_1(%arg0: i32, %arg1: i32) -> (i32, i32) {
    %c0_i32 = arith.constant 0 : i32
    %c0_i32_0 = arith.constant 0 : i32
    return %arg1, %c0_i32 : i32, i32
  }
  func.func @transform_2(%arg0: i32, %arg1: i32) -> (i32, i32) {
    %c0_i32 = arith.constant 0 : i32
    %c0_i32_0 = arith.constant 0 : i32
    %c0_i32_1 = arith.constant 0 : i32
    return %c0_i32, %c0_i32_0 : i32, i32
  }
  func.func @transform_3(%arg0: i32, %arg1: i32) -> (i32, i32) {
    %c0_i32 = arith.constant 0 : i32
    %c0_i32_0 = arith.constant 0 : i32
    return %arg0, %c0_i32 : i32, i32
  }
}

</mosaic_0001>

<llo_original>
// kernel: tpu_custom_call.1
$region0: #{tpu_custom_call.1}
  #allocation0 [shape = 'u32[]', space=smem, size = 0x4, offset = 0x4, fixed_abs, tag = 'smem constant byte address 0x4 - core index']
  #allocation1 [shape = 'u32[144,128]{1,0:T(1,128)}', space=vmem, size = 0x12000, scoped, tag = 'internal scratch']
  %s0 = inlined_call_operand.vmem [shape: f32[300,160], index: 0, kind: input, shape index: {}]
  %s1 = inlined_call_operand.vmem [shape: bf16[160,128], index: 1, kind: input, shape index: {}]
  %s2 = inlined_call_operand.vmem [shape: f32[1,128], index: 2, kind: input, shape index: {}]
  %s3 = inlined_call_operand.hbm [shape: f32[300,128], index: 3, kind: output, shape index: {}]
  %s4 = sld [smem:[#allocation0]]
  $region53: #{tpu_custom_call.1} parent=0
    _
  %s6 = ssub.s32 1, %s4
  %s7 = scalar_select 0, %s6, %s4
  $region1: #{tpu_custom_call.1} parent=0
    #allocation2 [shape = 'u8[262144]{0}', space=vmem, size = 0x40000, scoped, tag = 'output window, operand 0']
    #allocation3 [shape = 's32[2]{0}', space=sflag, size = 0x8, scoped, tag = 'scoped memory for tpu_custom_call.1']
    %8 = vsyncpa [#allocation3], 0
    %s9 = scalar_lea.sflag [#allocation3], 1
    %10 = vsyncpa %s9, 0
    loop: start=0, step=1, limit=4
    $region2: #{tpu_custom_call.1} parent=1 // loop_pre_header
      _
    $region3: #{tpu_custom_call.1} parent=1 // loop_header
      %s12 = sphi 0, %s16
      %p13 = scmp.ge.s32.totalorder %s12, 4
      %s19 = sphi 0, %s31
      %s20 = sphi 0, %s27
      %s21 = sphi 0, %s19
      %s22 = sphi 0, %s20
      %s23 = sphi 0, %s21
      %s24 = sphi 0, %s22
      %s36 = sphi 0, %s38
      %s39 = sphi 0, %s36
      %s40 = sphi 0, %s39
      %s56 = sphi 0, %s40
      %s62 = sphi 0, %s64
      %s65 = sphi 0, %s62
      %s66 = sphi 0, %s65
      %s82 = sphi 0, %s66
      %s86 = sphi 0, %s86
      %s88 = sphi 0, %s86
      %s89 = sphi 0, %s88
      %s103 = sphi 0, %s89
      %s109 = sphi 0, %s111
      %s112 = sphi 0, %s109
      %s113 = sphi 0, %s112
      %s129 = sphi 0, %s113
    $region4: #{tpu_custom_call.1} parent=1 // loop_header_branch
      %15 = sbr.rel (%p13) target = $region8
    $region5: #{tpu_custom_call.1} parent=1 // loop_body
      %s17 = ssub.s32 %s12, 1
      %s18 = ssub.s32 %s12, 2
      %s25 = sadd.s32 1, %s20
      %p26 = scmp.ge.s32.totalorder %s25, 1
      %s27 = scalar_select %p26, 0, %s25
      %s28 = sadd.s32 1, %s19
      %s29 = scalar_select %p26, %s28, %s19
      %p30 = scmp.ge.s32.totalorder %s29, 2
      %s31 = scalar_select %p30, 0, %s29
      %s32 = ssub.s32 %s19, %s31
      %s33 = ssub.s32 %s20, %s27
      %s34 = sor.u32 %s32, %s33
      %p35 = scmp.eq.s32.totalorder %s34, 0
      %s37 = sadd.s32 %s36, 1
      %s38 = scalar_select %p35, %s36, %s37
      %p41 = pneg %p35
      %p42 = scmp.eq.s32.totalorder %s12, 1
      %p43 = por %p41, %p42
      %p44 = scmp.ne.s32.totalorder %s36, %s39
      %p45 = scmp.eq.s32.totalorder %s12, 0
      %p46 = por %p44, %p45
      %p47 = scmp.ne.s32.totalorder %s36, %s39
      %p48 = scmp.eq.s32.totalorder %s17, 1
      %p49 = por %p47, %p48
      %p50 = scmp.ne.s32.totalorder %s39, %s40
      %p51 = scmp.eq.s32.totalorder %s17, 0
      %p52 = por %p50, %p51
      %p53 = scmp.ne.s32.totalorder %s39, %s40
      %p54 = scmp.eq.s32.totalorder %s18, 1
      %p55 = por %p53, %p54
      %p57 = scmp.ne.s32.totalorder %s40, %s56
      %p58 = scmp.eq.s32.totalorder %s18, 0
      %p59 = por %p57, %p58
      %s60 = ssub.s32 %s20, %s27
      %p61 = scmp.eq.s32.totalorder %s60, 0
      %s63 = sadd.s32 %s62, 1
      %s64 = scalar_select %p61, %s62, %s63
      %p67 = pneg %p61
      %p68 = scmp.eq.s32.totalorder %s12, 1
      %p69 = por %p67, %p68
      %p70 = scmp.ne.s32.totalorder %s62, %s65
      %p71 = scmp.eq.s32.totalorder %s12, 0
      %p72 = por %p70, %p71
      %p73 = scmp.ne.s32.totalorder %s62, %s65
      %p74 = scmp.eq.s32.totalorder %s17, 1
      %p75 = por %p73, %p74
      %p76 = scmp.ne.s32.totalorder %s65, %s66
      %p77 = scmp.eq.s32.totalorder %s17, 0
      %p78 = por %p76, %p77
      %p79 = scmp.ne.s32.totalorder %s65, %s66
      %p80 = scmp.eq.s32.totalorder %s18, 1
      %p81 = por %p79, %p80
      %p83 = scmp.ne.s32.totalorder %s66, %s82
      %p84 = scmp.eq.s32.totalorder %s18, 0
      %p85 = por %p83, %p84
      %s87 = sadd.s32 %s86, 1
      %p90 = scmp.eq.s32.totalorder %s12, 1
      %p91 = scmp.ne.s32.totalorder %s86, %s88
      %p92 = scmp.eq.s32.totalorder %s12, 0
      %p93 = por %p91, %p92
      %p94 = scmp.ne.s32.totalorder %s86, %s88
      %p95 = scmp.eq.s32.totalorder %s17, 1
      %p96 = por %p94, %p95
      %p97 = scmp.ne.s32.totalorder %s88, %s89
      %p98 = scmp.eq.s32.totalorder %s17, 0
      %p99 = por %p97, %p98
      %p100 = scmp.ne.s32.totalorder %s88, %s89
      %p101 = scmp.eq.s32.totalorder %s18, 1
      %p102 = por %p100, %p101
      %p104 = scmp.ne.s32.totalorder %s89, %s103
      %p105 = scmp.eq.s32.totalorder %s18, 0
      %p106 = por %p104, %p105
      %s107 = ssub.s32 %s19, %s31
      %p108 = scmp.eq.s32.totalorder %s107, 0
      %s110 = sadd.s32 %s109, 1
      %s111 = scalar_select %p108, %s109, %s110
      %p114 = pneg %p108
      %p115 = scmp.eq.s32.totalorder %s12, 1
      %p116 = por %p114, %p115
      %p117 = scmp.ne.s32.totalorder %s109, %s112
      %p118 = scmp.eq.s32.totalorder %s12, 0
      %p119 = por %p117, %p118
      %p120 = scmp.ne.s32.totalorder %s109, %s112
      %p121 = scmp.eq.s32.totalorder %s17, 1
      %p122 = por %p120, %p121
      %p123 = scmp.ne.s32.totalorder %s112, %s113
      %p124 = scmp.eq.s32.totalorder %s17, 0
      %p125 = por %p123, %p124
      %p126 = scmp.ne.s32.totalorder %s112, %s113
      %p127 = scmp.eq.s32.totalorder %s18, 1
      %p128 = por %p126, %p127
      %p130 = scmp.ne.s32.totalorder %s113, %s129
      %p131 = scmp.eq.s32.totalorder %s18, 0
      %p132 = por %p130, %p131
      %p133 = scmp.le.s32.totalorder 1, %s12
      %p134 = scmp.lt.s32.totalorder %s12, 3
      %p135 = pnand %p133, %p134
      %p136 = pneg %p135
      // Predicated region
      $region9: #{tpu_custom_call.1} parent=5 // pred_check
        _
      $region10: #{tpu_custom_call.1} parent=5 // pred_check_branch
        %138 = sbr.rel (%p135) target = $region12
      $region11: #{tpu_custom_call.1} parent=5 // pred_region
        %s139 = ssub.s32 %s12, 1
        // Predicated region
        $region13: #{tpu_custom_call.1} parent=11 // pred_check
          %p140 = pneg %p78
        $region14: #{tpu_custom_call.1} parent=11 // pred_check_branch
          %142 = sbr.rel (%p140) target = $region16
        $region15: #{tpu_custom_call.1} parent=11 // pred_region
          %s143 = smul.u32 20, %s22
          %p144 = scmp.lt.s32.totalorder %s143, 19
          %s145 = scalar_select %p144, %s143, 19
          %s146 = smul.addr %s145, 4
          %s147 = scalar_lea.vmem %s1, %s146
          %s148 = smul.u32 20, %s22
        $region16: #{tpu_custom_call.1} parent=11 // pred_fallthru
          _
        // Predicated region
        $region17: #{tpu_custom_call.1} parent=11 // pred_check
          %p149 = pneg %p99
        $region18: #{tpu_custom_call.1} parent=11 // pred_check_branch
          %151 = sbr.rel (%p149) target = $region20
        $region19: #{tpu_custom_call.1} parent=11 // pred_region
          _
        $region20: #{tpu_custom_call.1} parent=11 // pred_fallthru
          _
      $region12: #{tpu_custom_call.1} parent=5 // pred_fallthru
        _
      %p152 = scmp.lt.s32.totalorder %s12, 2
      // Predicated region
      $region21: #{tpu_custom_call.1} parent=5 // pred_check
        %p153 = pneg %p152
      $region22: #{tpu_custom_call.1} parent=5 // pred_check_branch
        %155 = sbr.rel (%p153) target = $region24
      $region23: #{tpu_custom_call.1} parent=5 // pred_region
        // Predicated region
        $region25: #{tpu_custom_call.1} parent=23 // pred_check
          %p156 = pneg %p46
        $region26: #{tpu_custom_call.1} parent=23 // pred_check_branch
          %158 = sbr.rel (%p156) target = $region28
        $region27: #{tpu_custom_call.1} parent=23 // pred_region
          %s159 = smul.u32 32, %s19
          %s160 = smul.u32 2, %s20
          %s161 = ssub.s32 38, %s159
          %p162 = scmp.lt.s32.totalorder %s161, 32
          %s163 = scalar_select %p162, %s161, 32
          %s164 = smul.u32 128, %s163
          %s165 = smul.u32 %s164, 2
          %p166 = scmp.lt.s32.totalorder %s159, 37
          %s167 = scalar_select %p166, %s159, 37
          %p168 = scmp.lt.s32.totalorder %s160, 1
          %s169 = scalar_select %p168, %s160, 1
          %s170 = smul.addr %s167, 2
          %s171 = sadd.s32 %s169, %s170
          %s172 = smul.addr %s171, 8
          %s173 = scalar_lea.vmem %s0, %s172
          %s174 = smul.u32 32, %s19
          %s175 = smul.u32 2, %s20
          %s176 = ssub.s32 38, %s174
          %p177 = scmp.lt.s32.totalorder %s176, 32
          %s178 = scalar_select %p177, %s176, 32
          %s179 = smul.u32 128, %s178
          %s180 = smul.u32 %s179, 2
        $region28: #{tpu_custom_call.1} parent=23 // pred_fallthru
          _
      $region24: #{tpu_custom_call.1} parent=5 // pred_fallthru
        _
      %p181 = scmp.le.s32.totalorder 1, %s12
      %p182 = scmp.lt.s32.totalorder %s12, 3
      %p183 = pnand %p181, %p182
      %p184 = pneg %p183
      // Predicated region
      $region29: #{tpu_custom_call.1} parent=5 // pred_check
        _
      $region30: #{tpu_custom_call.1} parent=5 // pred_check_branch
        %186 = sbr.rel (%p183) target = $region32
      $region31: #{tpu_custom_call.1} parent=5 // pred_region
        %s187 = ssub.s32 %s12, 1
        %s188 = smul.u32 32, %s21
        %s189 = smul.u32 2, %s22
        %s190 = ssub.s32 38, %s188
        %p191 = scmp.lt.s32.totalorder %s190, 32
        %s192 = scalar_select %p191, %s190, 32
        %s193 = smul.u32 128, %s192
        %s194 = smul.u32 %s193, 2
        %p195 = scmp.lt.s32.totalorder %s188, 37
        %s196 = scalar_select %p195, %s188, 37
        %p197 = scmp.lt.s32.totalorder %s189, 1
        %s198 = scalar_select %p197, %s189, 1
        %s199 = smul.addr %s196, 2
        %s200 = sadd.s32 %s198, %s199
        %s201 = smul.addr %s200, 8
        %s202 = scalar_lea.vmem %s0, %s201
        %p203 = pneg %p52
        %p204 = pneg %p49
        %s205 = smul.u32 20, %s22
        %p206 = scmp.lt.s32.totalorder %s205, 19
        %s207 = scalar_select %p206, %s205, 19
        %s208 = smul.addr %s207, 4
        %s209 = scalar_lea.vmem %s1, %s208
        %p210 = pneg %p78
        %p211 = pneg %p75
        %p212 = pneg %p99
        %p213 = pneg %p96
        %p214 = pneg %p125
        %p215 = pneg %p122
        %s216 = sand.u32 %s112, 1
        %s217 = scalar_lea.sflag [#allocation3], %s216
        %s218 = sand.u32 %s112, 1
        %s219 = smul.addr %s218, 256
        %s220 = scalar_lea.vmem [#allocation2], %s219
        %s221 = smul.u32 32, %s21
        %s222 = smul.u32 2, %s22
        %s223 = ssub.s32 38, %s221
        %p224 = scmp.lt.s32.totalorder %s223, 32
        %s225 = scalar_select %p224, %s223, 32
        %s226 = smul.u32 128, %s225
        %s227 = smul.u32 %s226, 2
        %p228 = scmp.lt.s32.totalorder %s221, 37
        %s229 = scalar_select %p228, %s221, 37
        %p230 = scmp.lt.s32.totalorder %s222, 1
        %s231 = scalar_select %p230, %s222, 1
        %s232 = smul.addr %s229, 2
        %s233 = sadd.s32 %s231, %s232
        %s234 = smul.addr %s233, 8
        %s235 = scalar_lea.vmem %s0, %s234
        %s236 = smul.u32 32, %s21
        %s237 = smul.u32 2, %s22
        %s238 = ssub.s32 38, %s236
        %p239 = scmp.lt.s32.totalorder %s238, 32
        %s240 = scalar_select %p239, %s238, 32
        %s241 = smul.u32 128, %s240
        %s242 = smul.u32 %s241, 2
        %s243 = smul.u32 20, %s22
        %p244 = scmp.lt.s32.totalorder %s243, 19
        %s245 = scalar_select %p244, %s243, 19
        %s246 = smul.addr %s245, 4
        %s247 = scalar_lea.vmem %s1, %s246
        %s248 = smul.u32 20, %s22
        %s249 = smul.u32 32, %s21
        %s250 = ssub.s32 38, %s249
        %p251 = scmp.lt.s32.totalorder %s250, 32
        %s252 = scalar_select %p251, %s250, 32
        %s253 = smul.u32 128, %s252
        %v255 = vld [vmem:[%s235] sm:$0xff]
        %v256 = vld [vmem:[%s235 + $0x8] sm:$0xff]
        %v257 = vld [vmem:[%s235 + $0x10] sm:$0xff]
        %v258 = vld [vmem:[%s235 + $0x18] sm:$0xff]
        %v259 = vld [vmem:[%s235 + $0x20] sm:$0xff]
        %v260 = vld [vmem:[%s235 + $0x28] sm:$0xff]
        %v261 = vld [vmem:[%s235 + $0x30] sm:$0xff]
        %v262 = vld [vmem:[%s235 + $0x38] sm:$0xff]
        %v263 = vld [vmem:[%s235 + $0x40] sm:$0xff]
        %v264 = vld [vmem:[%s235 + $0x48] sm:$0xff]
        %v265 = vld [vmem:[%s235 + $0x50] sm:$0xff]
        %v266 = vld [vmem:[%s235 + $0x58] sm:$0xff]
        %v267 = vld [vmem:[%s235 + $0x60] sm:$0xff]
        %v268 = vld [vmem:[%s235 + $0x68] sm:$0xff]
        %v269 = vld [vmem:[%s235 + $0x70] sm:$0xff]
        %v270 = vld [vmem:[%s235 + $0x78] sm:$0xff]
        %v271 = vld [vmem:[%s235 + $0x80] sm:$0xff]
        %v272 = vld [vmem:[%s235 + $0x88] sm:$0xff]
        %v273 = vld [vmem:[%s235 + $0x90] sm:$0xff]
        %v274 = vld [vmem:[%s235 + $0x98] sm:$0xff]
        %v275 = vld [vmem:[%s235 + $0xa0] sm:$0xff]
        %v276 = vld [vmem:[%s235 + $0xa8] sm:$0xff]
        %v277 = vld [vmem:[%s235 + $0xb0] sm:$0xff]
        %v278 = vld [vmem:[%s235 + $0xb8] sm:$0xff]
        %v279 = vld [vmem:[%s235 + $0xc0] sm:$0xff]
        %v280 = vld [vmem:[%s235 + $0xc8] sm:$0xff]
        %v281 = vld [vmem:[%s235 + $0xd0] sm:$0xff]
        %v282 = vld [vmem:[%s235 + $0xd8] sm:$0xff]
        %v283 = vld [vmem:[%s235 + $0xe0] sm:$0xff]
        %v284 = vld [vmem:[%s235 + $0xe8] sm:$0xff]
        %v285 = vld [vmem:[%s235 + $0xf0] sm:$0xff]
        %v286 = vld [vmem:[%s235 + $0xf8] sm:$0xff]
        %v287 = vld [vmem:[%s235 + $0x100] sm:$0xff]
        %v288 = vld [vmem:[%s235 + $0x108] sm:$0xff]
        %v289 = vld [vmem:[%s235 + $0x110] sm:$0xff]
        %v290 = vld [vmem:[%s235 + $0x118] sm:$0xff]
        %v291 = vld [vmem:[%s235 + $0x120] sm:$0xff]
        %v292 = vld [vmem:[%s235 + $0x128] sm:$0xff]
        %v293 = vld [vmem:[%s235 + $0x130] sm:$0xff]
        %v294 = vld [vmem:[%s235 + $0x138] sm:$0xff]
        %v295 = vld [vmem:[%s235 + $0x140] sm:$0xff]
        %v296 = vld [vmem:[%s235 + $0x148] sm:$0xff]
        %v297 = vld [vmem:[%s235 + $0x150] sm:$0xff]
        %v298 = vld [vmem:[%s235 + $0x158] sm:$0xff]
        %v299 = vld [vmem:[%s235 + $0x160] sm:$0xff]
        %v300 = vld [vmem:[%s235 + $0x168] sm:$0xff]
        %v301 = vld [vmem:[%s235 + $0x170] sm:$0xff]
        %v302 = vld [vmem:[%s235 + $0x178] sm:$0xff]
        %v303 = vld [vmem:[%s235 + $0x180] sm:$0xff]
        %v304 = vld [vmem:[%s235 + $0x188] sm:$0xff]
        %v305 = vld [vmem:[%s235 + $0x190] sm:$0xff]
        %v306 = vld [vmem:[%s235 + $0x198] sm:$0xff]
        %v307 = vld [vmem:[%s235 + $0x1a0] sm:$0xff]
        %v308 = vld [vmem:[%s235 + $0x1a8] sm:$0xff]
        %v309 = vld [vmem:[%s235 + $0x1b0] sm:$0xff]
        %v310 = vld [vmem:[%s235 + $0x1b8] sm:$0xff]
        %v311 = vld [vmem:[%s235 + $0x1c0] sm:$0xff]
        %v312 = vld [vmem:[%s235 + $0x1c8] sm:$0xff]
        %v313 = vld [vmem:[%s235 + $0x1d0] sm:$0xff]
        %v314 = vld [vmem:[%s235 + $0x1d8] sm:$0xff]
        %v315 = vld [vmem:[%s235 + $0x1e0] sm:$0xff]
        %v316 = vld [vmem:[%s235 + $0x1e8] sm:$0xff]
        %v317 = vld [vmem:[%s235 + $0x1f0] sm:$0xff]
        %v318 = vld [vmem:[%s235 + $0x1f8] sm:$0xff]
        %v319 = vpack.c.bf16 %v257, %v255
        %v320 = vpack.c.bf16 %v258, %v256
        %v321 = vpack.c.bf16 %v261, %v259
        %v322 = vpack.c.bf16 %v262, %v260
        %v323 = vpack.c.bf16 %v265, %v263
        %v324 = vpack.c.bf16 %v266, %v264
        %v325 = vpack.c.bf16 %v269, %v267
        %v326 = vpack.c.bf16 %v270, %v268
        %v327 = vpack.c.bf16 %v273, %v271
        %v328 = vpack.c.bf16 %v274, %v272
        %v329 = vpack.c.bf16 %v277, %v275
        %v330 = vpack.c.bf16 %v278, %v276
        %v331 = vpack.c.bf16 %v281, %v279
        %v332 = vpack.c.bf16 %v282, %v280
        %v333 = vpack.c.bf16 %v285, %v283
        %v334 = vpack.c.bf16 %v286, %v284
        %v335 = vpack.c.bf16 %v289, %v287
        %v336 = vpack.c.bf16 %v290, %v288
        %v337 = vpack.c.bf16 %v293, %v291
        %v338 = vpack.c.bf16 %v294, %v292
        %v339 = vpack.c.bf16 %v297, %v295
        %v340 = vpack.c.bf16 %v298, %v296
        %v341 = vpack.c.bf16 %v301, %v299
        %v342 = vpack.c.bf16 %v302, %v300
        %v343 = vpack.c.bf16 %v305, %v303
        %v344 = vpack.c.bf16 %v306, %v304
        %v345 = vpack.c.bf16 %v309, %v307
        %v346 = vpack.c.bf16 %v310, %v308
        %v347 = vpack.c.bf16 %v313, %v311
        %v348 = vpack.c.bf16 %v314, %v312
        %v349 = vpack.c.bf16 %v317, %v315
        %v350 = vpack.c.bf16 %v318, %v316
        %v351 = vld [vmem:[%s247] sm:$0xf]
        %v352 = vld [vmem:[%s247 + $0x4] sm:$0xf]
        %v353 = vld [vmem:[%s247 + $0x8] sm:$0xf]
        %v354 = vld [vmem:[%s247 + $0xc] sm:$0xf]
        %v355 = vld [vmem:[%s247 + $0x10] sm:$0xf]
        %v356 = vld [vmem:[%s247 + $0x14] sm:$0xf]
        %v357 = vld [vmem:[%s247 + $0x18] sm:$0xf]
        %v358 = vld [vmem:[%s247 + $0x1c] sm:$0xf]
        %v359 = vld [vmem:[%s247 + $0x20] sm:$0xf]
        %v360 = vld [vmem:[%s247 + $0x24] sm:$0xf]
        %v361 = vld [vmem:[%s247 + $0x28] sm:$0xf]
        %v362 = vld [vmem:[%s247 + $0x2c] sm:$0xf]
        %v363 = vld [vmem:[%s247 + $0x30] sm:$0xf]
        %v364 = vld [vmem:[%s247 + $0x34] sm:$0xf]
        %v365 = vld [vmem:[%s247 + $0x38] sm:$0xf]
        %v366 = vld [vmem:[%s247 + $0x3c] sm:$0xf]
        %v367 = vld [vmem:[%s247 + $0x40] sm:$0xf]
        %v368 = vld [vmem:[%s247 + $0x44] sm:$0xf]
        %v369 = vld [vmem:[%s247 + $0x48] sm:$0xf]
        %v370 = vld [vmem:[%s247 + $0x4c] sm:$0xf]
        %v391 = vunpack.c.l.b16 %v351
        %v392 = vunpack.c.l.b16 %v352
        %v393 = vunpack.c.l.b16 %v353
        %v394 = vunpack.c.l.b16 %v354
        %v395 = vunpack.c.l.b16 %v355
        %v396 = vunpack.c.l.b16 %v356
        %v397 = vunpack.c.l.b16 %v357
        %v398 = vunpack.c.l.b16 %v358
        %v399 = vunpack.c.l.b16 %v359
        %v400 = vunpack.c.l.b16 %v360
        %v401 = vunpack.c.l.b16 %v361
        %v402 = vunpack.c.l.b16 %v362
        %v403 = vunpack.c.l.b16 %v363
        %v404 = vunpack.c.l.b16 %v364
        %v405 = vunpack.c.l.b16 %v365
        %v406 = vunpack.c.l.b16 %v366
        %v407 = vunpack.c.l.b16 %v367
        %v408 = vunpack.c.l.b16 %v368
        %v409 = vunpack.c.l.b16 %v369
        %v410 = vunpack.c.l.b16 %v370
        %v411 = vpack.c.b16 %v392, %v391
        %v412 = vpack.c.b16 %v394, %v393
        %v413 = vpack.c.b16 %v396, %v395
        %v414 = vpack.c.b16 %v398, %v397
        %v415 = vpack.c.b16 %v400, %v399
        %v416 = vpack.c.b16 %v402, %v401
        %v417 = vpack.c.b16 %v404, %v403
        %v418 = vpack.c.b16 %v406, %v405
        %v419 = vpack.c.b16 %v408, %v407
        %v420 = vpack.c.b16 %v410, %v409
        %vm431 = vcmask 261120
        %v433 = vsel %vm431, %v320, 0
        %v436 = vsel %vm431, %v322, 0
        %v439 = vsel %vm431, %v324, 0
        %v442 = vsel %vm431, %v326, 0
        %v445 = vsel %vm431, %v328, 0
        %v448 = vsel %vm431, %v330, 0
        %v451 = vsel %vm431, %v332, 0
        %v454 = vsel %vm431, %v334, 0
        %v457 = vsel %vm431, %v336, 0
        %v460 = vsel %vm431, %v338, 0
        %v463 = vsel %vm431, %v340, 0
        %v466 = vsel %vm431, %v342, 0
        %v469 = vsel %vm431, %v344, 0
        %v472 = vsel %vm431, %v346, 0
        %v475 = vsel %vm431, %v348, 0
        %v478 = vsel %vm431, %v350, 0
        %480 = vmatprep.subr.bf16.mxu0 0
        %481 = vmatpush1.bf16.msra.mxu0 %v411
        %482 = vmatprep.subr.bf16.mxu0 0
        %483 = vmatpush1.bf16.msra.mxu0 %v412
        %484 = vmatprep.subr.bf16.mxu0 0
        %485 = vmatpush1.bf16.msra.mxu0 %v413
        %486 = vmatprep.subr.bf16.mxu0 0
        %487 = vmatpush1.bf16.msra.mxu0 %v414
        %488 = vmatprep.subr.bf16.mxu0 0
        %489 = vmatpush1.bf16.msra.mxu0 %v415
        %490 = vmatprep.subr.bf16.mxu0 0
        %491 = vmatpush1.bf16.msra.mxu0 %v416
        %492 = vmatprep.subr.bf16.mxu0 0
        %493 = vmatpush1.bf16.msra.mxu0 %v417
        %494 = vmatprep.subr.bf16.mxu0 0
        %495 = vmatpush1.bf16.msra.mxu0 %v418
        %496 = vmatprep.subr.bf16.mxu0 0
        %497 = vmatpush1.bf16.msra.mxu0 %v419
        %498 = vmatprep.subr.bf16.mxu0 0
        %499 = vmatpush1.bf16.msra.mxu0 %v420
        %500 = vmatprep.subr.bf16.mxu0 0
        %501 = vmatpush1.bf16.msra.mxu0 0
        %502 = vmatprep.subr.bf16.mxu0 0
        %503 = vmatpush1.bf16.msra.mxu0 0
        %504 = vmatprep.subr.bf16.mxu0 0
        %505 = vmatpush1.bf16.msra.mxu0 0
        %506 = vmatprep.subr.bf16.mxu0 0
        %507 = vmatpush1.bf16.msra.mxu0 0
        %508 = vmatprep.subr.bf16.mxu0 0
        %509 = vmatpush1.bf16.msra.mxu0 0
        %510 = vmatprep.subr.bf16.mxu0 0
        %511 = vmatpush1.bf16.msra.mxu0 0
        %512 = vmatprep.mubr.bf16.mxu0 %v433
        %513 = vmatmul.mubr.bf16.gmra.mrb[0].mxu0 %v319
        %v514 = vpop.f32.mrb[0].mxu0
        %v515 = vadd.f32 0.0, %v514
        %v516 = vpop.f32.mrb[0].mxu0
        %v517 = vpop.f32.mrb[0].mxu0
        %v518 = vadd.f32 0.0, %v517
        %v519 = vpop.f32.mrb[0].mxu0
        %520 = vmatprep.mubr.bf16.mxu0 %v436
        %521 = vmatmul.mubr.bf16.gmra.mrb[0].mxu0 %v321
        %v522 = vpop.f32.mrb[0].mxu0
        %v523 = vadd.f32 0.0, %v522
        %v524 = vpop.f32.mrb[0].mxu0
        %v525 = vpop.f32.mrb[0].mxu0
        %v526 = vadd.f32 0.0, %v525
        %v527 = vpop.f32.mrb[0].mxu0
        %528 = vmatprep.mubr.bf16.mxu0 %v439
        %529 = vmatmul.mubr.bf16.gmra.mrb[0].mxu0 %v323
        %v530 = vpop.f32.mrb[0].mxu0
        %v531 = vadd.f32 0.0, %v530
        %v532 = vpop.f32.mrb[0].mxu0
        %v533 = vpop.f32.mrb[0].mxu0
        %v534 = vadd.f32 0.0, %v533
        %v535 = vpop.f32.mrb[0].mxu0
        %536 = vmatprep.mubr.bf16.mxu0 %v442
        %537 = vmatmul.mubr.bf16.gmra.mrb[0].mxu0 %v325
        %v538 = vpop.f32.mrb[0].mxu0
        %v539 = vadd.f32 0.0, %v538
        %v540 = vpop.f32.mrb[0].mxu0
        %v541 = vpop.f32.mrb[0].mxu0
        %v542 = vadd.f32 0.0, %v541
        %v543 = vpop.f32.mrb[0].mxu0
        %544 = vmatprep.mubr.bf16.mxu0 %v445
        %545 = vmatmul.mubr.bf16.gmra.mrb[0].mxu0 %v327
        %v546 = vpop.f32.mrb[0].mxu0
        %v547 = vadd.f32 0.0, %v546
        %v548 = vpop.f32.mrb[0].mxu0
        %v549 = vpop.f32.mrb[0].mxu0
        %v550 = vadd.f32 0.0, %v549
        %v551 = vpop.f32.mrb[0].mxu0
        %552 = vmatprep.mubr.bf16.mxu0 %v448
        %553 = vmatmul.mubr.bf16.gmra.mrb[0].mxu0 %v329
        %v554 = vpop.f32.mrb[0].mxu0
        %v555 = vadd.f32 0.0, %v554
        %v556 = vpop.f32.mrb[0].mxu0
        %v557 = vpop.f32.mrb[0].mxu0
        %v558 = vadd.f32 0.0, %v557
        %v559 = vpop.f32.mrb[0].mxu0
        %560 = vmatprep.mubr.bf16.mxu0 %v451
        %561 = vmatmul.mubr.bf16.gmra.mrb[0].mxu0 %v331
        %v562 = vpop.f32.mrb[0].mxu0
        %v563 = vadd.f32 0.0, %v562
        %v564 = vpop.f32.mrb[0].mxu0
        %v565 = vpop.f32.mrb[0].mxu0
        %v566 = vadd.f32 0.0, %v565
        %v567 = vpop.f32.mrb[0].mxu0
        %568 = vmatprep.mubr.bf16.mxu0 %v454
        %569 = vmatmul.mubr.bf16.gmra.mrb[0].mxu0 %v333
        %v570 = vpop.f32.mrb[0].mxu0
        %v571 = vadd.f32 0.0, %v570
        %v572 = vpop.f32.mrb[0].mxu0
        %v573 = vpop.f32.mrb[0].mxu0
        %v574 = vadd.f32 0.0, %v573
        %v575 = vpop.f32.mrb[0].mxu0
        %576 = vmatprep.mubr.bf16.mxu0 %v457
        %577 = vmatmul.mubr.bf16.gmra.mrb[0].mxu0 %v335
        %v578 = vpop.f32.mrb[0].mxu0
        %v579 = vadd.f32 0.0, %v578
        %v580 = vpop.f32.mrb[0].mxu0
        %v581 = vpop.f32.mrb[0].mxu0
        %v582 = vadd.f32 0.0, %v581
        %v583 = vpop.f32.mrb[0].mxu0
        %584 = vmatprep.mubr.bf16.mxu0 %v460
        %585 = vmatmul.mubr.bf16.gmra.mrb[0].mxu0 %v337
        %v586 = vpop.f32.mrb[0].mxu0
        %v587 = vadd.f32 0.0, %v586
        %v588 = vpop.f32.mrb[0].mxu0
        %v589 = vpop.f32.mrb[0].mxu0
        %v590 = vadd.f32 0.0, %v589
        %v591 = vpop.f32.mrb[0].mxu0
        %592 = vmatprep.mubr.bf16.mxu0 %v463
        %593 = vmatmul.mubr.bf16.gmra.mrb[0].mxu0 %v339
        %v594 = vpop.f32.mrb[0].mxu0
        %v595 = vadd.f32 0.0, %v594
        %v596 = vpop.f32.mrb[0].mxu0
        %v597 = vpop.f32.mrb[0].mxu0
        %v598 = vadd.f32 0.0, %v597
        %v599 = vpop.f32.mrb[0].mxu0
        %600 = vmatprep.mubr.bf16.mxu0 %v466
        %601 = vmatmul.mubr.bf16.gmra.mrb[0].mxu0 %v341
        %v602 = vpop.f32.mrb[0].mxu0
        %v603 = vadd.f32 0.0, %v602
        %v604 = vpop.f32.mrb[0].mxu0
        %v605 = vpop.f32.mrb[0].mxu0
        %v606 = vadd.f32 0.0, %v605
        %v607 = vpop.f32.mrb[0].mxu0
        %608 = vmatprep.mubr.bf16.mxu0 %v469
        %609 = vmatmul.mubr.bf16.gmra.mrb[0].mxu0 %v343
        %v610 = vpop.f32.mrb[0].mxu0
        %v611 = vadd.f32 0.0, %v610
        %v612 = vpop.f32.mrb[0].mxu0
        %v613 = vpop.f32.mrb[0].mxu0
        %v614 = vadd.f32 0.0, %v613
        %v615 = vpop.f32.mrb[0].mxu0
        %616 = vmatprep.mubr.bf16.mxu0 %v472
        %617 = vmatmul.mubr.bf16.gmra.mrb[0].mxu0 %v345
        %v618 = vpop.f32.mrb[0].mxu0
        %v619 = vadd.f32 0.0, %v618
        %v620 = vpop.f32.mrb[0].mxu0
        %v621 = vpop.f32.mrb[0].mxu0
        %v622 = vadd.f32 0.0, %v621
        %v623 = vpop.f32.mrb[0].mxu0
        %624 = vmatprep.mubr.bf16.mxu0 %v475
        %625 = vmatmul.mubr.bf16.gmra.mrb[0].mxu0 %v347
        %v626 = vpop.f32.mrb[0].mxu0
        %v627 = vadd.f32 0.0, %v626
        %v628 = vpop.f32.mrb[0].mxu0
        %v629 = vpop.f32.mrb[0].mxu0
        %v630 = vadd.f32 0.0, %v629
        %v631 = vpop.f32.mrb[0].mxu0
        %632 = vmatprep.mubr.bf16.mxu0 %v478
        %633 = vmatmul.mubr.bf16.gmra.mrb[0].mxu0 %v349
        %v634 = vpop.f32.mrb[0].mxu0
        %v635 = vadd.f32 0.0, %v634
        %v636 = vpop.f32.mrb[0].mxu0
        %v637 = vpop.f32.mrb[0].mxu0
        %v638 = vadd.f32 0.0, %v637
        %v639 = vpop.f32.mrb[0].mxu0
        %640 = vdwg.mxu0
        %p641 = scmp.eq.s32.totalorder %s22, 0
        // Predicated region
        $region33: #{tpu_custom_call.1} parent=31 // pred_check
          %p642 = pneg %p641
        $region34: #{tpu_custom_call.1} parent=31 // pred_check_branch
          %644 = sbr.rel (%p642) target = $region36
        $region35: #{tpu_custom_call.1} parent=31 // pred_region
          %v645 = vld [vmem:[%s2] sm:$0x1]
          %v647 = vlaneseq
          %v648 = vshrl.u32 %v647, 7
          %v649 = vsub.s32 0, %v648
          %v650 = vrot.slane %v645, %v649
          %v652 = vadd.f32 %v650, %v515
          %v653 = vadd.f32 %v650, %v518
          %v654 = vadd.f32 %v650, %v523
          %v655 = vadd.f32 %v650, %v526
          %v656 = vadd.f32 %v650, %v531
          %v657 = vadd.f32 %v650, %v534
          %v658 = vadd.f32 %v650, %v539
          %v659 = vadd.f32 %v650, %v542
          %v660 = vadd.f32 %v650, %v547
          %v661 = vadd.f32 %v650, %v550
          %v662 = vadd.f32 %v650, %v555
          %v663 = vadd.f32 %v650, %v558
          %v664 = vadd.f32 %v650, %v563
          %v665 = vadd.f32 %v650, %v566
          %v666 = vadd.f32 %v650, %v571
          %v667 = vadd.f32 %v650, %v574
          %v668 = vadd.f32 %v650, %v579
          %v669 = vadd.f32 %v650, %v582
          %v670 = vadd.f32 %v650, %v587
          %v671 = vadd.f32 %v650, %v590
          %v672 = vadd.f32 %v650, %v595
          %v673 = vadd.f32 %v650, %v598
          %v674 = vadd.f32 %v650, %v603
          %v675 = vadd.f32 %v650, %v606
          %v676 = vadd.f32 %v650, %v611
          %v677 = vadd.f32 %v650, %v614
          %v678 = vadd.f32 %v650, %v619
          %v679 = vadd.f32 %v650, %v622
          %v680 = vadd.f32 %v650, %v627
          %v681 = vadd.f32 %v650, %v630
          %v682 = vadd.f32 %v650, %v635
          %v683 = vadd.f32 %v650, %v638
          %684 = vst [vmem:[%s220] sm:$0xff] %v652
          %685 = vst [vmem:[%s220 + $0x8] sm:$0xff] %v653
          %686 = vst [vmem:[%s220 + $0x10] sm:$0xff] %v654
          %687 = vst [vmem:[%s220 + $0x18] sm:$0xff] %v655
          %688 = vst [vmem:[%s220 + $0x20] sm:$0xff] %v656
          %689 = vst [vmem:[%s220 + $0x28] sm:$0xff] %v657
          %690 = vst [vmem:[%s220 + $0x30] sm:$0xff] %v658
          %691 = vst [vmem:[%s220 + $0x38] sm:$0xff] %v659
          %692 = vst [vmem:[%s220 + $0x40] sm:$0xff] %v660
          %693 = vst [vmem:[%s220 + $0x48] sm:$0xff] %v661
          %694 = vst [vmem:[%s220 + $0x50] sm:$0xff] %v662
          %695 = vst [vmem:[%s220 + $0x58] sm:$0xff] %v663
          %696 = vst [vmem:[%s220 + $0x60] sm:$0xff] %v664
          %697 = vst [vmem:[%s220 + $0x68] sm:$0xff] %v665
          %698 = vst [vmem:[%s220 + $0x70] sm:$0xff] %v666
          %699 = vst [vmem:[%s220 + $0x78] sm:$0xff] %v667
          %700 = vst [vmem:[%s220 + $0x80] sm:$0xff] %v668
          %701 = vst [vmem:[%s220 + $0x88] sm:$0xff] %v669
          %702 = vst [vmem:[%s220 + $0x90] sm:$0xff] %v670
          %703 = vst [vmem:[%s220 + $0x98] sm:$0xff] %v671
          %704 = vst [vmem:[%s220 + $0xa0] sm:$0xff] %v672
          %705 = vst [vmem:[%s220 + $0xa8] sm:$0xff] %v673
          %706 = vst [vmem:[%s220 + $0xb0] sm:$0xff] %v674
          %707 = vst [vmem:[%s220 + $0xb8] sm:$0xff] %v675
          %708 = vst [vmem:[%s220 + $0xc0] sm:$0xff] %v676
          %709 = vst [vmem:[%s220 + $0xc8] sm:$0xff] %v677
          %710 = vst [vmem:[%s220 + $0xd0] sm:$0xff] %v678
          %711 = vst [vmem:[%s220 + $0xd8] sm:$0xff] %v679
          %712 = vst [vmem:[%s220 + $0xe0] sm:$0xff] %v680
          %713 = vst [vmem:[%s220 + $0xe8] sm:$0xff] %v681
          %714 = vst [vmem:[%s220 + $0xf0] sm:$0xff] %v682
          %715 = vst [vmem:[%s220 + $0xf8] sm:$0xff] %v683
        $region36: #{tpu_custom_call.1} parent=31 // pred_fallthru
          _
        %p716 = scmp.ne.s32.totalorder %s22, 0
        // Predicated region
        $region37: #{tpu_custom_call.1} parent=31 // pred_check
          %p717 = pneg %p716
        $region38: #{tpu_custom_call.1} parent=31 // pred_check_branch
          %719 = sbr.rel (%p717) target = $region40
        $region39: #{tpu_custom_call.1} parent=31 // pred_region
          %v720 = vld [vmem:[%s220] sm:$0xff]
          %v721 = vld [vmem:[%s220 + $0x8] sm:$0xff]
          %v722 = vld [vmem:[%s220 + $0x10] sm:$0xff]
          %v723 = vld [vmem:[%s220 + $0x18] sm:$0xff]
          %v724 = vld [vmem:[%s220 + $0x20] sm:$0xff]
          %v725 = vld [vmem:[%s220 + $0x28] sm:$0xff]
          %v726 = vld [vmem:[%s220 + $0x30] sm:$0xff]
          %v727 = vld [vmem:[%s220 + $0x38] sm:$0xff]
          %v728 = vld [vmem:[%s220 + $0x40] sm:$0xff]
          %v729 = vld [vmem:[%s220 + $0x48] sm:$0xff]
          %v730 = vld [vmem:[%s220 + $0x50] sm:$0xff]
          %v731 = vld [vmem:[%s220 + $0x58] sm:$0xff]
          %v732 = vld [vmem:[%s220 + $0x60] sm:$0xff]
          %v733 = vld [vmem:[%s220 + $0x68] sm:$0xff]
          %v734 = vld [vmem:[%s220 + $0x70] sm:$0xff]
          %v735 = vld [vmem:[%s220 + $0x78] sm:$0xff]
          %v736 = vld [vmem:[%s220 + $0x80] sm:$0xff]
          %v737 = vld [vmem:[%s220 + $0x88] sm:$0xff]
          %v738 = vld [vmem:[%s220 + $0x90] sm:$0xff]
          %v739 = vld [vmem:[%s220 + $0x98] sm:$0xff]
          %v740 = vld [vmem:[%s220 + $0xa0] sm:$0xff]
          %v741 = vld [vmem:[%s220 + $0xa8] sm:$0xff]
          %v742 = vld [vmem:[%s220 + $0xb0] sm:$0xff]
          %v743 = vld [vmem:[%s220 + $0xb8] sm:$0xff]
          %v744 = vld [vmem:[%s220 + $0xc0] sm:$0xff]
          %v745 = vld [vmem:[%s220 + $0xc8] sm:$0xff]
          %v746 = vld [vmem:[%s220 + $0xd0] sm:$0xff]
          %v747 = vld [vmem:[%s220 + $0xd8] sm:$0xff]
          %v748 = vld [vmem:[%s220 + $0xe0] sm:$0xff]
          %v749 = vld [vmem:[%s220 + $0xe8] sm:$0xff]
          %v750 = vld [vmem:[%s220 + $0xf0] sm:$0xff]
          %v751 = vld [vmem:[%s220 + $0xf8] sm:$0xff]
          %v752 = vadd.f32 %v720, %v515
          %v753 = vadd.f32 %v721, %v518
          %v754 = vadd.f32 %v722, %v523
          %v755 = vadd.f32 %v723, %v526
          %v756 = vadd.f32 %v724, %v531
          %v757 = vadd.f32 %v725, %v534
          %v758 = vadd.f32 %v726, %v539
          %v759 = vadd.f32 %v727, %v542
          %v760 = vadd.f32 %v728, %v547
          %v761 = vadd.f32 %v729, %v550
          %v762 = vadd.f32 %v730, %v555
          %v763 = vadd.f32 %v731, %v558
          %v764 = vadd.f32 %v732, %v563
          %v765 = vadd.f32 %v733, %v566
          %v766 = vadd.f32 %v734, %v571
          %v767 = vadd.f32 %v735, %v574
          %v768 = vadd.f32 %v736, %v579
          %v769 = vadd.f32 %v737, %v582
          %v770 = vadd.f32 %v738, %v587
          %v771 = vadd.f32 %v739, %v590
          %v772 = vadd.f32 %v740, %v595
          %v773 = vadd.f32 %v741, %v598
          %v774 = vadd.f32 %v742, %v603
          %v775 = vadd.f32 %v743, %v606
          %v776 = vadd.f32 %v744, %v611
          %v777 = vadd.f32 %v745, %v614
          %v778 = vadd.f32 %v746, %v619
          %v779 = vadd.f32 %v747, %v622
          %v780 = vadd.f32 %v748, %v627
          %v781 = vadd.f32 %v749, %v630
          %v782 = vadd.f32 %v750, %v635
          %v783 = vadd.f32 %v751, %v638
          %784 = vst [vmem:[%s220] sm:$0xff] %v752
          %785 = vst [vmem:[%s220 + $0x8] sm:$0xff] %v753
          %786 = vst [vmem:[%s220 + $0x10] sm:$0xff] %v754
          %787 = vst [vmem:[%s220 + $0x18] sm:$0xff] %v755
          %788 = vst [vmem:[%s220 + $0x20] sm:$0xff] %v756
          %789 = vst [vmem:[%s220 + $0x28] sm:$0xff] %v757
          %790 = vst [vmem:[%s220 + $0x30] sm:$0xff] %v758
          %791 = vst [vmem:[%s220 + $0x38] sm:$0xff] %v759
          %792 = vst [vmem:[%s220 + $0x40] sm:$0xff] %v760
          %793 = vst [vmem:[%s220 + $0x48] sm:$0xff] %v761
          %794 = vst [vmem:[%s220 + $0x50] sm:$0xff] %v762
          %795 = vst [vmem:[%s220 + $0x58] sm:$0xff] %v763
          %796 = vst [vmem:[%s220 + $0x60] sm:$0xff] %v764
          %797 = vst [vmem:[%s220 + $0x68] sm:$0xff] %v765
          %798 = vst [vmem:[%s220 + $0x70] sm:$0xff] %v766
          %799 = vst [vmem:[%s220 + $0x78] sm:$0xff] %v767
          %800 = vst [vmem:[%s220 + $0x80] sm:$0xff] %v768
          %801 = vst [vmem:[%s220 + $0x88] sm:$0xff] %v769
          %802 = vst [vmem:[%s220 + $0x90] sm:$0xff] %v770
          %803 = vst [vmem:[%s220 + $0x98] sm:$0xff] %v771
          %804 = vst [vmem:[%s220 + $0xa0] sm:$0xff] %v772
          %805 = vst [vmem:[%s220 + $0xa8] sm:$0xff] %v773
          %806 = vst [vmem:[%s220 + $0xb0] sm:$0xff] %v774
          %807 = vst [vmem:[%s220 + $0xb8] sm:$0xff] %v775
          %808 = vst [vmem:[%s220 + $0xc0] sm:$0xff] %v776
          %809 = vst [vmem:[%s220 + $0xc8] sm:$0xff] %v777
          %810 = vst [vmem:[%s220 + $0xd0] sm:$0xff] %v778
          %811 = vst [vmem:[%s220 + $0xd8] sm:$0xff] %v779
          %812 = vst [vmem:[%s220 + $0xe0] sm:$0xff] %v780
          %813 = vst [vmem:[%s220 + $0xe8] sm:$0xff] %v781
          %814 = vst [vmem:[%s220 + $0xf0] sm:$0xff] %v782
          %815 = vst [vmem:[%s220 + $0xf8] sm:$0xff] %v783
        $region40: #{tpu_custom_call.1} parent=31 // pred_fallthru
          _
        %s816 = sand.u32 %s112, 1
        %s817 = scalar_lea.sflag [#allocation3], %s816
        %s818 = sand.u32 %s112, 1
        %s819 = smul.addr %s818, 256
        %s820 = scalar_lea.vmem [#allocation2], %s819
        // Predicated region
        $region41: #{tpu_custom_call.1} parent=31 // pred_check
          %p821 = pneg %p122
        $region42: #{tpu_custom_call.1} parent=31 // pred_check_branch
          %823 = sbr.rel (%p821) target = $region44
        $region43: #{tpu_custom_call.1} parent=31 // pred_region
          %s824 = smul.u32 32, %s21
          %s825 = ssub.s32 38, %s824
          %p826 = scmp.lt.s32.totalorder %s825, 32
          %s827 = scalar_select %p826, %s825, 32
          %s828 = smul.u32 128, %s827
          %s830 = ssub.s32 4096, %s828
          %831 = vsyncadd %s817, %s830
          %p832 = scmp.ne.s32.totalorder 0, %s828
          %s833 = smul.addr %s824, 128
          %s834 = scalar_lea.hbm %s3, %s833
          %s835 = smul.u32 8, %s827
          %s836 = sshll.u32 %s820, 4
          %s837 = int_to_ptr.vmem [resolvable:$true] %s836
          %s838 = sshll.u32 %s835, 4
          %842 = dma.vmem_to_hbm [thread:$0]  (%p832), %s837, %s838, %s834, %s817, 128, 128, 8
        $region44: #{tpu_custom_call.1} parent=31 // pred_fallthru
          _
      $region32: #{tpu_custom_call.1} parent=5 // pred_fallthru
        _
      %p843 = scmp.le.s32.totalorder 2, %s12
      // Predicated region
      $region45: #{tpu_custom_call.1} parent=5 // pred_check
        %p844 = pneg %p843
      $region46: #{tpu_custom_call.1} parent=5 // pred_check_branch
        %846 = sbr.rel (%p844) target = $region48
      $region47: #{tpu_custom_call.1} parent=5 // pred_region
        %s847 = ssub.s32 %s12, 2
        // Predicated region
        $region49: #{tpu_custom_call.1} parent=47 // pred_check
          %p848 = pneg %p128
        $region50: #{tpu_custom_call.1} parent=47 // pred_check_branch
          %850 = sbr.rel (%p848) target = $region52
        $region51: #{tpu_custom_call.1} parent=47 // pred_region
          %s851 = sand.u32 %s113, 1
          %s852 = scalar_lea.sflag [#allocation3], %s851
          %s853 = sand.u32 %s113, 1
          %s854 = smul.addr %s853, 256
          %s855 = scalar_lea.vmem [#allocation2], %s854
          %856 = dma.done %s852, 4096
        $region52: #{tpu_custom_call.1} parent=47 // pred_fallthru
          _
      $region48: #{tpu_custom_call.1} parent=5 // pred_fallthru
        _
    $region6: #{tpu_custom_call.1} parent=1 // loop_footer
      %s16 = sadd.s32 1, %s12
    $region7: #{tpu_custom_call.1} parent=1 // loop_footer_branch
      %11 = sbr.rel target = $region3
    $region8: #{tpu_custom_call.1} parent=1 // loop_exit
      _
    %857 = vsyncpa [#allocation3], 1
    %s858 = scalar_lea.sflag [#allocation3], 1
    %859 = vsyncpa %s858, 1

</llo_original>
